<compile_context>
chip_gen: v7x
topology: tpu7x:2x2x1
jax: 0.10.0
libtpu: 0.0.40
codegen_flags: <defaults>
</compile_context>

<pallas_src>
import jax
import jax.numpy as jnp
from jax.experimental import pallas as pl
from jax.experimental.pallas import tpu as pltpu


def se_block_kernel(x_ref, w1t_ref, w2t_ref, o_ref):
    # x_ref : (bB, C, HW)  native NCHW slab (HW on lanes, C on sublanes)
    # w1t_ref: (C, Cr) f32    w2t_ref: (Cr, C) f32
    x = x_ref[...]                                        # native dtype

    # ---- squeeze: global average pool over the spatial (lane) axis ----
    pooled = jnp.mean(x, axis=-1, dtype=jnp.float32)      # (bB, C), f32 accum

    # ---- excitation: fc1 -> ReLU -> fc2 -> sigmoid (tiny, f32) ----
    h = jnp.dot(pooled, w1t_ref[...],
                preferred_element_type=jnp.float32)       # (bB, Cr)
    h = jnp.maximum(h, 0.0)
    y = jnp.dot(h, w2t_ref[...],
                preferred_element_type=jnp.float32)       # (bB, C)
    y = jax.nn.sigmoid(y)

    # ---- scale: lane-broadcast the per-(batch, channel) gate over HW ----
    o_ref[...] = x * y.astype(x.dtype)[:, :, None]


def se_block(x, w1, w2, *, target_tile_bytes=2 * 1024 * 1024, min_grid_steps=4):
    """SE block forward.

    x : (B, C, H, W)  NCHW, like the PyTorch module.
    w1: (C//r, C)     first nn.Linear weight (PyTorch convention, no bias).
    w2: (C, C//r)     second nn.Linear weight.
    Returns (B, C, H, W).
    """
    B, C, H, W = x.shape
    Cr = w1.shape[0]
    HW = H * W

    # Native layout: channels on sublanes, HW on lanes. No transposes.
    x3 = x.reshape(B, C, HW)
    # Pre-transpose + pre-cast weights once in the wrapper (kernel contracts
    # on last dims directly; weights are resident across grid steps).
    w1t = jnp.transpose(w1).astype(jnp.float32)           # (C, Cr)
    w2t = jnp.transpose(w2).astype(jnp.float32)           # (Cr, C)

    itemsize = jnp.dtype(x.dtype).itemsize
    per_sample = HW * C * itemsize

    # Batch tile: ~target_tile_bytes per tile, but keep the grid >= ~4 steps
    # (when B allows) so double-buffering / megacore split actually engage.
    bB_by_budget = max(1, target_tile_bytes // per_sample)
    want_steps = min(min_grid_steps, B)
    bB_by_grid = max(1, B // want_steps)
    bB = int(max(1, min(B, bB_by_budget, bB_by_grid)))
    grid = (pl.cdiv(B, bB),)                              # partial last block OK

    # VMEM footprint: in + out tiles (double-buffered) + resident f32 weights.
    w_bytes = (w1.size + w2.size) * 4
    vmem_estimate = 4 * bB * per_sample + 2 * w_bytes + (1 << 20)
    compiler_kwargs = dict(dimension_semantics=("parallel",))
    if vmem_estimate > (16 << 20):      # exceeds the most conservative scoped default
        try:
            vmem_cap = pltpu.get_tpu_info().vmem_capacity_bytes
        except Exception:
            vmem_cap = 64 << 20         # safe per-TC floor (v7x)
        compiler_kwargs["vmem_limit_bytes"] = int(min(vmem_estimate + (8 << 20),
                                                      vmem_cap))
    # TODO(synk): add a spatial (HW) tiling fallback (two-pass pool-sum then
    # scale) for feature maps where even a single sample exceeds the per-TC
    # VMEM budget (relevant on v7x's 64 MiB).

    cost = pl.CostEstimate(
        flops=4 * B * C * Cr + 2 * B * HW * C,            # tiny FCs + pool/scale
        transcendentals=B * C,                            # sigmoid
        bytes_accessed=2 * B * HW * C * itemsize + w_bytes,
    )

    out3 = pl.pallas_call(
        se_block_kernel,
        out_shape=jax.ShapeDtypeStruct((B, C, HW), x.dtype),
        grid=grid,
        in_specs=[
            pl.BlockSpec((bB, C, HW), lambda b: (b, 0, 0)),  # full C, HW extent
            pl.BlockSpec((C, Cr), lambda b: (0, 0)),         # resident weights
            pl.BlockSpec((Cr, C), lambda b: (0, 0)),
        ],
        out_specs=pl.BlockSpec((bB, C, HW), lambda b: (b, 0, 0)),
        compiler_params=pltpu.CompilerParams(**compiler_kwargs),
        cost_estimate=cost,
    )(x3, w1t, w2t)

    return out3.reshape(B, C, H, W)


def se_block_reference(x, w1, w2):
    """Pure-JAX reference matching the PyTorch forward."""
    pooled = jnp.mean(x, axis=(2, 3))                     # (B, C)
    h = jnp.maximum(pooled @ w1.T, 0.0)                   # (B, C//r)
    y = jax.nn.sigmoid(h @ w2.T)                          # (B, C)
    return x * y[:, :, None, None]


if __name__ == "__main__":
    # Small shapes consistent with SEBlock(channels=128, reduction=16).
    B, C, H, W = 8, 128, 16, 16
    reduction = 16
    Cr = C // reduction

    key = jax.random.PRNGKey(0)
    kx, k1, k2 = jax.random.split(key, 3)

    x = jax.random.normal(kx, (B, C, H, W), dtype=jnp.float32)
    # Deterministic synthetic weights (PyTorch nn.Linear weight shapes).
    w1 = jax.random.normal(k1, (Cr, C), dtype=jnp.float32) * 0.1
    w2 = jax.random.normal(k2, (C, Cr), dtype=jnp.float32) * 0.1

    out = se_block(x, w1, w2)
    out = jax.block_until_ready(out)

    ref = se_block_reference(x, w1, w2)
    assert out.shape == (B, C, H, W)
    assert jnp.allclose(out, ref, atol=1e-5, rtol=1e-5), "mismatch vs reference"

    print("KERNEL_OK")
</pallas_src>

<mosaic_0001>
module attributes {stable_mosaic.version = 11 : i64} {
  func.func @se_block_kernel(%arg0: i32, %arg1: memref<2x128x256xf32, #tpu.memory_space<vmem>>, %arg2: memref<128x8xf32, #tpu.memory_space<vmem>>, %arg3: memref<8x128xf32, #tpu.memory_space<vmem>>, %arg4: memref<2x128x256xf32, #tpu.memory_space<vmem>>) attributes {dimension_semantics = [#tpu.dimension_semantics<parallel>], iteration_bounds = array<i64: 4>, scalar_prefetch = 0 : i64, scratch_operands = 0 : i64, tpu.core_type = #tpu.core_type<tc>, window_params = [{transform_indices = @transform_0, window_bounds = array<i64: 2, 128, 256>}, {pipeline_mode = #tpu.pipeline_mode<synchronous>, transform_indices = @transform_1, window_bounds = array<i64: 128, 8>}, {pipeline_mode = #tpu.pipeline_mode<synchronous>, transform_indices = @transform_2, window_bounds = array<i64: 8, 128>}, {transform_indices = @transform_3, window_bounds = array<i64: 2, 128, 256>}]} {
    %c0 = arith.constant 0 : index
    %c0_0 = arith.constant 0 : index
    %c0_1 = arith.constant 0 : index
    %0 = vector.load %arg1[%c0, %c0_0, %c0_1] : memref<2x128x256xf32, #tpu.memory_space<vmem>>, vector<2x128x256xf32>
    %cst = arith.constant dense<0.000000e+00> : vector<2x128xf32>
    %1 = vector.multi_reduction <add>, %0, %cst [2] : vector<2x128x256xf32> to vector<2x128xf32>
    %cst_2 = arith.constant 2.560000e+02 : f32
    %2 = vector.broadcast %cst_2 : f32 to vector<2x128xf32>
    %3 = arith.divf %1, %2 : vector<2x128xf32>
    %c0_3 = arith.constant 0 : index
    %c0_4 = arith.constant 0 : index
    %4 = vector.load %arg2[%c0_3, %c0_4] : memref<128x8xf32, #tpu.memory_space<vmem>>, vector<128x8xf32>
    %cst_5 = arith.constant dense<0.000000e+00> : vector<2x8xf32>
    %5 = tpu.matmul %3, %4, %cst_5 {dimension_numbers = #tpu.dot_dimension_numbers<[1], [0], [0], [1], [0, 0, 1, 1], [], []>} : vector<2x128xf32>, vector<128x8xf32>, vector<2x8xf32> -> vector<2x8xf32>
    %cst_6 = arith.constant 0.000000e+00 : f32
    %6 = vector.broadcast %cst_6 : f32 to vector<2x8xf32>
    %7 = arith.maximumf %5, %6 : vector<2x8xf32>
    %c0_7 = arith.constant 0 : index
    %c0_8 = arith.constant 0 : index
    %8 = vector.load %arg3[%c0_7, %c0_8] : memref<8x128xf32, #tpu.memory_space<vmem>>, vector<8x128xf32>
    %cst_9 = arith.constant dense<0.000000e+00> : vector<2x128xf32>
    %9 = tpu.matmul %7, %8, %cst_9 {dimension_numbers = #tpu.dot_dimension_numbers<[1], [0], [0], [1], [0, 0, 1, 1], [], []>} : vector<2x8xf32>, vector<8x128xf32>, vector<2x128xf32> -> vector<2x128xf32>
    %10 = arith.negf %9 : vector<2x128xf32>
    %11 = math.exp %10 : vector<2x128xf32>
    %cst_10 = arith.constant 1.000000e+00 : f32
    %12 = vector.broadcast %cst_10 : f32 to vector<2x128xf32>
    %13 = arith.addf %12, %11 : vector<2x128xf32>
    %14 = arith.divf %12, %13 : vector<2x128xf32>
    %15 = vector.shape_cast %14 : vector<2x128xf32> to vector<2x128x1xf32>
    %16 = vector.broadcast %15 : vector<2x128x1xf32> to vector<2x128x256xf32>
    %17 = arith.mulf %0, %16 : vector<2x128x256xf32>
    %c0_11 = arith.constant 0 : index
    %c0_12 = arith.constant 0 : index
    %c0_13 = arith.constant 0 : index
    %18 = vector.load %arg4[%c0_11, %c0_12, %c0_13] : memref<2x128x256xf32, #tpu.memory_space<vmem>>, vector<2x128x256xf32>
    tpu.vector_store %arg4[%c0_11, %c0_12, %c0_13], %17 {strides = array<i32>} : memref<2x128x256xf32, #tpu.memory_space<vmem>>, vector<2x128x256xf32>,
    return
  }
  func.func @transform_0(%arg0: i32) -> (i32, i32, i32) {
    %c0_i32 = arith.constant 0 : i32
    %c0_i32_0 = arith.constant 0 : i32
    %c0_i32_1 = arith.constant 0 : i32
    return %arg0, %c0_i32, %c0_i32_0 : i32, i32, i32
  }
  func.func @transform_1(%arg0: i32) -> (i32, i32) {
    %c0_i32 = arith.constant 0 : i32
    %c0_i32_0 = arith.constant 0 : i32
    %c0_i32_1 = arith.constant 0 : i32
    return %c0_i32, %c0_i32_0 : i32, i32
  }
  func.func @transform_2(%arg0: i32) -> (i32, i32) {
    %c0_i32 = arith.constant 0 : i32
    %c0_i32_0 = arith.constant 0 : i32
    %c0_i32_1 = arith.constant 0 : i32
    return %c0_i32, %c0_i32_0 : i32, i32
  }
  func.func @transform_3(%arg0: i32) -> (i32, i32, i32) {
    %c0_i32 = arith.constant 0 : i32
    %c0_i32_0 = arith.constant 0 : i32
    %c0_i32_1 = arith.constant 0 : i32
    return %arg0, %c0_i32, %c0_i32_0 : i32, i32, i32
  }
}

</mosaic_0001>

<llo_original>
// kernel: tpu_custom_call.1
$region0: #{tpu_custom_call.1}
  #allocation0 [shape = 'u32[]', space=smem, size = 0x4, offset = 0x4, fixed_abs, tag = 'smem constant byte address 0x4 - core index']
  #allocation1 [shape = 'u32[144,128]{1,0:T(1,128)}', space=vmem, size = 0x12000, scoped, tag = 'internal scratch']
  %s0 = inlined_call_operand.hbm [shape: f32[8,128,256], index: 0, kind: input, shape index: {}]
  %s1 = inlined_call_operand.vmem [shape: f32[128,8], index: 1, kind: input, shape index: {}]
  %s2 = inlined_call_operand.vmem [shape: f32[8,128], index: 2, kind: input, shape index: {}]
  %s3 = inlined_call_operand.hbm [shape: f32[8,128,256], index: 3, kind: output, shape index: {}]
  %s4 = sld [smem:[#allocation0]]
  $region49: #{tpu_custom_call.1} parent=0
    _
  %s6 = ssub.s32 1, %s4
  %s7 = scalar_select 0, %s6, %s4
  $region1: #{tpu_custom_call.1} parent=0
    #allocation2 [shape = 'u8[524288]{0}', space=vmem, size = 0x80000, scoped, tag = 'input window, operand 0']
    #allocation3 [shape = 's32[2]{0}', space=sflag, size = 0x8, scoped, tag = 'scoped memory for tpu_custom_call.1']
    #allocation4 [shape = 's32[2]{0}', space=sflag, size = 0x8, scoped, tag = 'scoped memory for tpu_custom_call.1']
    #allocation5 [shape = 'u8[524288]{0}', space=vmem, size = 0x80000, scoped, tag = 'output window, operand 0']
    %8 = vsyncpa [#allocation3], 0
    %s9 = scalar_lea.sflag [#allocation3], 1
    %10 = vsyncpa %s9, 0
    %11 = vsyncpa [#allocation4], 0
    %s12 = scalar_lea.sflag [#allocation4], 1
    %13 = vsyncpa %s12, 0
    loop: start=0, step=1, limit=6
    $region2: #{tpu_custom_call.1} parent=1 // loop_pre_header
      _
    $region3: #{tpu_custom_call.1} parent=1 // loop_header
      %s15 = sphi 0, %s19
      %p16 = scmp.ge.s32.totalorder %s15, 6
      %s25 = sphi 0, %s27
      %s28 = sphi 0, %s25
      %s29 = sphi 0, %s28
      %s45 = sphi 0, %s29
      %s49 = sphi 0, %s49
      %s51 = sphi 0, %s49
      %s52 = sphi 0, %s51
      %s66 = sphi 0, %s52
      %s70 = sphi 0, %s70
      %s72 = sphi 0, %s70
      %s73 = sphi 0, %s72
      %s87 = sphi 0, %s73
      %s93 = sphi 0, %s95
      %s96 = sphi 0, %s93
      %s97 = sphi 0, %s96
      %s113 = sphi 0, %s97
    $region4: #{tpu_custom_call.1} parent=1 // loop_header_branch
      %18 = sbr.rel (%p16) target = $region8
    $region5: #{tpu_custom_call.1} parent=1 // loop_body
      %s20 = ssub.s32 %s15, 1
      %s21 = ssub.s32 %s15, 2
      %s22 = sadd.s32 %s15, 1
      %s23 = ssub.s32 %s15, %s22
      %p24 = scmp.eq.s32.totalorder %s23, 0
      %s26 = sadd.s32 %s25, 1
      %s27 = scalar_select %p24, %s25, %s26
      %p30 = pneg %p24
      %p31 = scmp.eq.s32.totalorder %s15, 3
      %p32 = por %p30, %p31
      %p33 = scmp.ne.s32.totalorder %s25, %s28
      %p34 = scmp.eq.s32.totalorder %s15, 0
      %p35 = por %p33, %p34
      %p36 = scmp.ne.s32.totalorder %s25, %s28
      %p37 = scmp.eq.s32.totalorder %s20, 3
      %p38 = por %p36, %p37
      %p39 = scmp.ne.s32.totalorder %s28, %s29
      %p40 = scmp.eq.s32.totalorder %s20, 0
      %p41 = por %p39, %p40
      %p42 = scmp.ne.s32.totalorder %s28, %s29
      %p43 = scmp.eq.s32.totalorder %s21, 3
      %p44 = por %p42, %p43
      %p46 = scmp.ne.s32.totalorder %s29, %s45
      %p47 = scmp.eq.s32.totalorder %s21, 0
      %p48 = por %p46, %p47
      %s50 = sadd.s32 %s49, 1
      %p53 = scmp.eq.s32.totalorder %s15, 3
      %p54 = scmp.ne.s32.totalorder %s49, %s51
      %p55 = scmp.eq.s32.totalorder %s15, 0
      %p56 = por %p54, %p55
      %p57 = scmp.ne.s32.totalorder %s49, %s51
      %p58 = scmp.eq.s32.totalorder %s20, 3
      %p59 = por %p57, %p58
      %p60 = scmp.ne.s32.totalorder %s51, %s52
      %p61 = scmp.eq.s32.totalorder %s20, 0
      %p62 = por %p60, %p61
      %p63 = scmp.ne.s32.totalorder %s51, %s52
      %p64 = scmp.eq.s32.totalorder %s21, 3
      %p65 = por %p63, %p64
      %p67 = scmp.ne.s32.totalorder %s52, %s66
      %p68 = scmp.eq.s32.totalorder %s21, 0
      %p69 = por %p67, %p68
      %s71 = sadd.s32 %s70, 1
      %p74 = scmp.eq.s32.totalorder %s15, 3
      %p75 = scmp.ne.s32.totalorder %s70, %s72
      %p76 = scmp.eq.s32.totalorder %s15, 0
      %p77 = por %p75, %p76
      %p78 = scmp.ne.s32.totalorder %s70, %s72
      %p79 = scmp.eq.s32.totalorder %s20, 3
      %p80 = por %p78, %p79
      %p81 = scmp.ne.s32.totalorder %s72, %s73
      %p82 = scmp.eq.s32.totalorder %s20, 0
      %p83 = por %p81, %p82
      %p84 = scmp.ne.s32.totalorder %s72, %s73
      %p85 = scmp.eq.s32.totalorder %s21, 3
      %p86 = por %p84, %p85
      %p88 = scmp.ne.s32.totalorder %s73, %s87
      %p89 = scmp.eq.s32.totalorder %s21, 0
      %p90 = por %p88, %p89
      %s91 = ssub.s32 %s15, %s22
      %p92 = scmp.eq.s32.totalorder %s91, 0
      %s94 = sadd.s32 %s93, 1
      %s95 = scalar_select %p92, %s93, %s94
      %p98 = pneg %p92
      %p99 = scmp.eq.s32.totalorder %s15, 3
      %p100 = por %p98, %p99
      %p101 = scmp.ne.s32.totalorder %s93, %s96
      %p102 = scmp.eq.s32.totalorder %s15, 0
      %p103 = por %p101, %p102
      %p104 = scmp.ne.s32.totalorder %s93, %s96
      %p105 = scmp.eq.s32.totalorder %s20, 3
      %p106 = por %p104, %p105
      %p107 = scmp.ne.s32.totalorder %s96, %s97
      %p108 = scmp.eq.s32.totalorder %s20, 0
      %p109 = por %p107, %p108
      %p110 = scmp.ne.s32.totalorder %s96, %s97
      %p111 = scmp.eq.s32.totalorder %s21, 3
      %p112 = por %p110, %p111
      %p114 = scmp.ne.s32.totalorder %s97, %s113
      %p115 = scmp.eq.s32.totalorder %s21, 0
      %p116 = por %p114, %p115
      %p117 = scmp.le.s32.totalorder 1, %s15
      %p118 = scmp.lt.s32.totalorder %s15, 5
      %p119 = pnand %p117, %p118
      %p120 = pneg %p119
      // Predicated region
      $region9: #{tpu_custom_call.1} parent=5 // pred_check
        _
      $region10: #{tpu_custom_call.1} parent=5 // pred_check_branch
        %122 = sbr.rel (%p119) target = $region12
      $region11: #{tpu_custom_call.1} parent=5 // pred_region
        %s123 = ssub.s32 %s15, 1
        // Predicated region
        $region13: #{tpu_custom_call.1} parent=11 // pred_check
          %p124 = pneg %p62
        $region14: #{tpu_custom_call.1} parent=11 // pred_check_branch
          %126 = sbr.rel (%p124) target = $region16
        $region15: #{tpu_custom_call.1} parent=11 // pred_region
          _
        $region16: #{tpu_custom_call.1} parent=11 // pred_fallthru
          _
        // Predicated region
        $region17: #{tpu_custom_call.1} parent=11 // pred_check
          %p127 = pneg %p83
        $region18: #{tpu_custom_call.1} parent=11 // pred_check_branch
          %129 = sbr.rel (%p127) target = $region20
        $region19: #{tpu_custom_call.1} parent=11 // pred_region
          _
        $region20: #{tpu_custom_call.1} parent=11 // pred_fallthru
          _
      $region12: #{tpu_custom_call.1} parent=5 // pred_fallthru
        _
      %p130 = scmp.lt.s32.totalorder %s15, 4
      // Predicated region
      $region21: #{tpu_custom_call.1} parent=5 // pred_check
        %p131 = pneg %p130
      $region22: #{tpu_custom_call.1} parent=5 // pred_check_branch
        %133 = sbr.rel (%p131) target = $region24
      $region23: #{tpu_custom_call.1} parent=5 // pred_region
        // Predicated region
        $region25: #{tpu_custom_call.1} parent=23 // pred_check
          %p134 = pneg %p35
        $region26: #{tpu_custom_call.1} parent=23 // pred_check_branch
          %136 = sbr.rel (%p134) target = $region28
        $region27: #{tpu_custom_call.1} parent=23 // pred_region
          %s137 = sand.u32 %s25, 1
          %s138 = scalar_lea.sflag [#allocation3], %s137
          %s139 = sand.u32 %s25, 1
          %s140 = smul.addr %s139, 512
          %s141 = scalar_lea.vmem [#allocation2], %s140
          %s142 = smul.u32 2, %s15
          %s144 = ssub.s32 8192, 8192
          %145 = vsyncadd %s138, %s144
          %s146 = smul.addr %s142, 32
          %s147 = smul.addr %s146, 128
          %s148 = scalar_lea.hbm %s0, %s147
          %s149 = sshll.u32 %s141, 4
          %s150 = int_to_ptr.vmem [resolvable:$true] %s149
          %155 = dma.hbm_to_vmem [thread:$0]  %s148, 8192, %s150, %s138, 256, 256, 16
        $region28: #{tpu_custom_call.1} parent=23 // pred_fallthru
          _
      $region24: #{tpu_custom_call.1} parent=5 // pred_fallthru
        _
      %p156 = scmp.le.s32.totalorder 1, %s15
      %p157 = scmp.lt.s32.totalorder %s15, 5
      %p158 = pnand %p156, %p157
      %p159 = pneg %p158
      // Predicated region
      $region29: #{tpu_custom_call.1} parent=5 // pred_check
        _
      $region30: #{tpu_custom_call.1} parent=5 // pred_check_branch
        %161 = sbr.rel (%p158) target = $region32
      $region31: #{tpu_custom_call.1} parent=5 // pred_region
        %s162 = ssub.s32 %s15, 1
        %s163 = sand.u32 %s28, 1
        %s164 = scalar_lea.sflag [#allocation3], %s163
        %s165 = sand.u32 %s28, 1
        %s166 = smul.addr %s165, 512
        %s167 = scalar_lea.vmem [#allocation2], %s166
        // Predicated region
        $region33: #{tpu_custom_call.1} parent=31 // pred_check
          %p168 = pneg %p41
        $region34: #{tpu_custom_call.1} parent=31 // pred_check_branch
          %170 = sbr.rel (%p168) target = $region36
        $region35: #{tpu_custom_call.1} parent=31 // pred_region
          %171 = dma.done %s164, 8192
        $region36: #{tpu_custom_call.1} parent=31 // pred_fallthru
          _
        %s172 = sand.u32 %s28, 1
        %s173 = scalar_lea.sflag [#allocation3], %s172
        %s174 = sand.u32 %s28, 1
        %s175 = smul.addr %s174, 512
        %s176 = scalar_lea.vmem [#allocation2], %s175
        %p177 = pneg %p41
        %p178 = pneg %p38
        %p179 = pneg %p62
        %p180 = pneg %p59
        %p181 = pneg %p83
        %p182 = pneg %p80
        %p183 = pneg %p109
        %p184 = pneg %p106
        %s185 = sand.u32 %s96, 1
        %s186 = scalar_lea.sflag [#allocation4], %s185
        %s187 = sand.u32 %s96, 1
        %s188 = smul.addr %s187, 512
        %s189 = scalar_lea.vmem [#allocation5], %s188
        %s190 = smul.u32 2, %s20
        %s191 = smul.u32 2, %s20
        %v192 = vld [vmem:[%s167] sm:$0xff]
        %v193 = vld [vmem:[%s167 + $0x8] sm:$0xff]
        %v194 = vld [vmem:[%s167 + $0x10] sm:$0xff]
        %v195 = vld [vmem:[%s167 + $0x18] sm:$0xff]
        %v196 = vld [vmem:[%s167 + $0x20] sm:$0xff]
        %v197 = vld [vmem:[%s167 + $0x28] sm:$0xff]
        %v198 = vld [vmem:[%s167 + $0x30] sm:$0xff]
        %v199 = vld [vmem:[%s167 + $0x38] sm:$0xff]
        %v200 = vld [vmem:[%s167 + $0x40] sm:$0xff]
        %v201 = vld [vmem:[%s167 + $0x48] sm:$0xff]
        %v202 = vld [vmem:[%s167 + $0x50] sm:$0xff]
        %v203 = vld [vmem:[%s167 + $0x58] sm:$0xff]
        %v204 = vld [vmem:[%s167 + $0x60] sm:$0xff]
        %v205 = vld [vmem:[%s167 + $0x68] sm:$0xff]
        %v206 = vld [vmem:[%s167 + $0x70] sm:$0xff]
        %v207 = vld [vmem:[%s167 + $0x78] sm:$0xff]
        %v208 = vld [vmem:[%s167 + $0x80] sm:$0xff]
        %v209 = vld [vmem:[%s167 + $0x88] sm:$0xff]
        %v210 = vld [vmem:[%s167 + $0x90] sm:$0xff]
        %v211 = vld [vmem:[%s167 + $0x98] sm:$0xff]
        %v212 = vld [vmem:[%s167 + $0xa0] sm:$0xff]
        %v213 = vld [vmem:[%s167 + $0xa8] sm:$0xff]
        %v214 = vld [vmem:[%s167 + $0xb0] sm:$0xff]
        %v215 = vld [vmem:[%s167 + $0xb8] sm:$0xff]
        %v216 = vld [vmem:[%s167 + $0xc0] sm:$0xff]
        %v217 = vld [vmem:[%s167 + $0xc8] sm:$0xff]
        %v218 = vld [vmem:[%s167 + $0xd0] sm:$0xff]
        %v219 = vld [vmem:[%s167 + $0xd8] sm:$0xff]
        %v220 = vld [vmem:[%s167 + $0xe0] sm:$0xff]
        %v221 = vld [vmem:[%s167 + $0xe8] sm:$0xff]
        %v222 = vld [vmem:[%s167 + $0xf0] sm:$0xff]
        %v223 = vld [vmem:[%s167 + $0xf8] sm:$0xff]
        %v224 = vld [vmem:[%s167 + $0x100] sm:$0xff]
        %v225 = vld [vmem:[%s167 + $0x108] sm:$0xff]
        %v226 = vld [vmem:[%s167 + $0x110] sm:$0xff]
        %v227 = vld [vmem:[%s167 + $0x118] sm:$0xff]
        %v228 = vld [vmem:[%s167 + $0x120] sm:$0xff]
        %v229 = vld [vmem:[%s167 + $0x128] sm:$0xff]
        %v230 = vld [vmem:[%s167 + $0x130] sm:$0xff]
        %v231 = vld [vmem:[%s167 + $0x138] sm:$0xff]
        %v232 = vld [vmem:[%s167 + $0x140] sm:$0xff]
        %v233 = vld [vmem:[%s167 + $0x148] sm:$0xff]
        %v234 = vld [vmem:[%s167 + $0x150] sm:$0xff]
        %v235 = vld [vmem:[%s167 + $0x158] sm:$0xff]
        %v236 = vld [vmem:[%s167 + $0x160] sm:$0xff]
        %v237 = vld [vmem:[%s167 + $0x168] sm:$0xff]
        %v238 = vld [vmem:[%s167 + $0x170] sm:$0xff]
        %v239 = vld [vmem:[%s167 + $0x178] sm:$0xff]
        %v240 = vld [vmem:[%s167 + $0x180] sm:$0xff]
        %v241 = vld [vmem:[%s167 + $0x188] sm:$0xff]
        %v242 = vld [vmem:[%s167 + $0x190] sm:$0xff]
        %v243 = vld [vmem:[%s167 + $0x198] sm:$0xff]
        %v244 = vld [vmem:[%s167 + $0x1a0] sm:$0xff]
        %v245 = vld [vmem:[%s167 + $0x1a8] sm:$0xff]
        %v246 = vld [vmem:[%s167 + $0x1b0] sm:$0xff]
        %v247 = vld [vmem:[%s167 + $0x1b8] sm:$0xff]
        %v248 = vld [vmem:[%s167 + $0x1c0] sm:$0xff]
        %v249 = vld [vmem:[%s167 + $0x1c8] sm:$0xff]
        %v250 = vld [vmem:[%s167 + $0x1d0] sm:$0xff]
        %v251 = vld [vmem:[%s167 + $0x1d8] sm:$0xff]
        %v252 = vld [vmem:[%s167 + $0x1e0] sm:$0xff]
        %v253 = vld [vmem:[%s167 + $0x1e8] sm:$0xff]
        %v254 = vld [vmem:[%s167 + $0x1f0] sm:$0xff]
        %v255 = vld [vmem:[%s167 + $0x1f8] sm:$0xff]
        %v256 = vadd.f32 %v192, %v193
        %257 = vadd.xlane.f32.xlu0 %v256
        %v258 = vpop.xlane.xlu0 %257
        %v259 = vadd.f32 %v194, %v195
        %260 = vadd.xlane.f32.xlu0 %v259
        %v261 = vpop.xlane.xlu0 %260
        %v262 = vadd.f32 %v196, %v197
        %263 = vadd.xlane.f32.xlu0 %v262
        %v264 = vpop.xlane.xlu0 %263
        %v265 = vadd.f32 %v198, %v199
        %266 = vadd.xlane.f32.xlu0 %v265
        %v267 = vpop.xlane.xlu0 %266
        %v268 = vadd.f32 %v200, %v201
        %269 = vadd.xlane.f32.xlu0 %v268
        %v270 = vpop.xlane.xlu0 %269
        %v271 = vadd.f32 %v202, %v203
        %272 = vadd.xlane.f32.xlu0 %v271
        %v273 = vpop.xlane.xlu0 %272
        %v274 = vadd.f32 %v204, %v205
        %275 = vadd.xlane.f32.xlu0 %v274
        %v276 = vpop.xlane.xlu0 %275
        %v277 = vadd.f32 %v206, %v207
        %278 = vadd.xlane.f32.xlu0 %v277
        %v279 = vpop.xlane.xlu0 %278
        %v280 = vadd.f32 %v208, %v209
        %281 = vadd.xlane.f32.xlu0 %v280
        %v282 = vpop.xlane.xlu0 %281
        %v283 = vadd.f32 %v210, %v211
        %284 = vadd.xlane.f32.xlu0 %v283
        %v285 = vpop.xlane.xlu0 %284
        %v286 = vadd.f32 %v212, %v213
        %287 = vadd.xlane.f32.xlu0 %v286
        %v288 = vpop.xlane.xlu0 %287
        %v289 = vadd.f32 %v214, %v215
        %290 = vadd.xlane.f32.xlu0 %v289
        %v291 = vpop.xlane.xlu0 %290
        %v292 = vadd.f32 %v216, %v217
        %293 = vadd.xlane.f32.xlu0 %v292
        %v294 = vpop.xlane.xlu0 %293
        %v295 = vadd.f32 %v218, %v219
        %296 = vadd.xlane.f32.xlu0 %v295
        %v297 = vpop.xlane.xlu0 %296
        %v298 = vadd.f32 %v220, %v221
        %299 = vadd.xlane.f32.xlu0 %v298
        %v300 = vpop.xlane.xlu0 %299
        %v301 = vadd.f32 %v222, %v223
        %302 = vadd.xlane.f32.xlu0 %v301
        %v303 = vpop.xlane.xlu0 %302
        %v304 = vadd.f32 %v224, %v225
        %305 = vadd.xlane.f32.xlu0 %v304
        %v306 = vpop.xlane.xlu0 %305
        %v307 = vadd.f32 %v226, %v227
        %308 = vadd.xlane.f32.xlu0 %v307
        %v309 = vpop.xlane.xlu0 %308
        %v310 = vadd.f32 %v228, %v229
        %311 = vadd.xlane.f32.xlu0 %v310
        %v312 = vpop.xlane.xlu0 %311
        %v313 = vadd.f32 %v230, %v231
        %314 = vadd.xlane.f32.xlu0 %v313
        %v315 = vpop.xlane.xlu0 %314
        %v316 = vadd.f32 %v232, %v233
        %317 = vadd.xlane.f32.xlu0 %v316
        %v318 = vpop.xlane.xlu0 %317
        %v319 = vadd.f32 %v234, %v235
        %320 = vadd.xlane.f32.xlu0 %v319
        %v321 = vpop.xlane.xlu0 %320
        %v322 = vadd.f32 %v236, %v237
        %323 = vadd.xlane.f32.xlu0 %v322
        %v324 = vpop.xlane.xlu0 %323
        %v325 = vadd.f32 %v238, %v239
        %326 = vadd.xlane.f32.xlu0 %v325
        %v327 = vpop.xlane.xlu0 %326
        %v328 = vadd.f32 %v240, %v241
        %329 = vadd.xlane.f32.xlu0 %v328
        %v330 = vpop.xlane.xlu0 %329
        %v331 = vadd.f32 %v242, %v243
        %332 = vadd.xlane.f32.xlu0 %v331
        %v333 = vpop.xlane.xlu0 %332
        %v334 = vadd.f32 %v244, %v245
        %335 = vadd.xlane.f32.xlu0 %v334
        %v336 = vpop.xlane.xlu0 %335
        %v337 = vadd.f32 %v246, %v247
        %338 = vadd.xlane.f32.xlu0 %v337
        %v339 = vpop.xlane.xlu0 %338
        %v340 = vadd.f32 %v248, %v249
        %341 = vadd.xlane.f32.xlu0 %v340
        %v342 = vpop.xlane.xlu0 %341
        %v343 = vadd.f32 %v250, %v251
        %344 = vadd.xlane.f32.xlu0 %v343
        %v345 = vpop.xlane.xlu0 %344
        %v346 = vadd.f32 %v252, %v253
        %347 = vadd.xlane.f32.xlu0 %v346
        %v348 = vpop.xlane.xlu0 %347
        %v349 = vadd.f32 %v254, %v255
        %350 = vadd.xlane.f32.xlu0 %v349
        %v351 = vpop.xlane.xlu0 %350
        %v352 = vrcp.pop 256.0
        %v353 = vmul.f32 %v258, %v352
        %v354 = vmul.f32 %v261, %v352
        %v355 = vmul.f32 %v264, %v352
        %v356 = vmul.f32 %v267, %v352
        %v357 = vmul.f32 %v270, %v352
        %v358 = vmul.f32 %v273, %v352
        %v359 = vmul.f32 %v276, %v352
        %v360 = vmul.f32 %v279, %v352
        %v361 = vmul.f32 %v282, %v352
        %v362 = vmul.f32 %v285, %v352
        %v363 = vmul.f32 %v288, %v352
        %v364 = vmul.f32 %v291, %v352
        %v365 = vmul.f32 %v294, %v352
        %v366 = vmul.f32 %v297, %v352
        %v367 = vmul.f32 %v300, %v352
        %v368 = vmul.f32 %v303, %v352
        %v369 = vmul.f32 %v306, %v352
        %v370 = vmul.f32 %v309, %v352
        %v371 = vmul.f32 %v312, %v352
        %v372 = vmul.f32 %v315, %v352
        %v373 = vmul.f32 %v318, %v352
        %v374 = vmul.f32 %v321, %v352
        %v375 = vmul.f32 %v324, %v352
        %v376 = vmul.f32 %v327, %v352
        %v377 = vmul.f32 %v330, %v352
        %v378 = vmul.f32 %v333, %v352
        %v379 = vmul.f32 %v336, %v352
        %v380 = vmul.f32 %v339, %v352
        %v381 = vmul.f32 %v342, %v352
        %v382 = vmul.f32 %v345, %v352
        %v383 = vmul.f32 %v348, %v352
        %v384 = vmul.f32 %v351, %v352
        %v385 = vld [vmem:[%s1] sm:$0xff]
        %v386 = vld [vmem:[%s1 + $0x8] sm:$0xff]
        %v387 = vld [vmem:[%s1 + $0x10] sm:$0xff]
        %v388 = vld [vmem:[%s1 + $0x18] sm:$0xff]
        %v389 = vld [vmem:[%s1 + $0x20] sm:$0xff]
        %v390 = vld [vmem:[%s1 + $0x28] sm:$0xff]
        %v391 = vld [vmem:[%s1 + $0x30] sm:$0xff]
        %v392 = vld [vmem:[%s1 + $0x38] sm:$0xff]
        %v393 = vld [vmem:[%s1 + $0x40] sm:$0xff]
        %v394 = vld [vmem:[%s1 + $0x48] sm:$0xff]
        %v395 = vld [vmem:[%s1 + $0x50] sm:$0xff]
        %v396 = vld [vmem:[%s1 + $0x58] sm:$0xff]
        %v397 = vld [vmem:[%s1 + $0x60] sm:$0xff]
        %v398 = vld [vmem:[%s1 + $0x68] sm:$0xff]
        %v399 = vld [vmem:[%s1 + $0x70] sm:$0xff]
        %v400 = vld [vmem:[%s1 + $0x78] sm:$0xff]
        %v433 = vlaneseq
        %v434 = vand.u32 %v433, 127
        %v435 = vlaneseq
        %v436 = vshrl.u32 %v435, 7
        %v437 = vsub.s32 %v434, %v436
        %v438 = vrot.slane %v353, %v437
        %v439 = vadd.s32 %v434, 4294967288
        %v440 = vlaneseq
        %v441 = vshrl.u32 %v440, 7
        %v442 = vsub.s32 %v439, %v441
        %v443 = vrot.slane %v354, %v442
        %vm444 = vcmask 130112
        %v445 = vsel %vm444, %v443, %v438
        %v446 = vadd.s32 %v434, 4294967280
        %v447 = vlaneseq
        %v448 = vshrl.u32 %v447, 7
        %v449 = vsub.s32 %v446, %v448
        %v450 = vrot.slane %v355, %v449
        %vm451 = vcmask 195712
        %v452 = vsel %vm451, %v450, %v445
        %v453 = vadd.s32 %v434, 4294967272
        %v454 = vlaneseq
        %v455 = vshrl.u32 %v454, 7
        %v456 = vsub.s32 %v453, %v455
        %v457 = vrot.slane %v356, %v456
        %vm458 = vcmask 261312
        %v459 = vsel %vm458, %v457, %v452
        %v460 = vadd.s32 %v434, 4294967264
        %v461 = vlaneseq
        %v462 = vshrl.u32 %v461, 7
        %v463 = vsub.s32 %v460, %v462
        %v464 = vrot.slane %v357, %v463
        %vm465 = vcmask 326912
        %v466 = vsel %vm465, %v464, %v459
        %v467 = vadd.s32 %v434, 4294967256
        %v468 = vlaneseq
        %v469 = vshrl.u32 %v468, 7
        %v470 = vsub.s32 %v467, %v469
        %v471 = vrot.slane %v358, %v470
        %vm472 = vcmask 392512
        %v473 = vsel %vm472, %v471, %v466
        %v474 = vadd.s32 %v434, 4294967248
        %v475 = vlaneseq
        %v476 = vshrl.u32 %v475, 7
        %v477 = vsub.s32 %v474, %v476
        %v478 = vrot.slane %v359, %v477
        %vm479 = vcmask 458112
        %v480 = vsel %vm479, %v478, %v473
        %v481 = vadd.s32 %v434, 4294967240
        %v482 = vlaneseq
        %v483 = vshrl.u32 %v482, 7
        %v484 = vsub.s32 %v481, %v483
        %v485 = vrot.slane %v360, %v484
        %vm486 = vcmask 523712
        %v487 = vsel %vm486, %v485, %v480
        %v488 = vadd.s32 %v434, 4294967232
        %v489 = vlaneseq
        %v490 = vshrl.u32 %v489, 7
        %v491 = vsub.s32 %v488, %v490
        %v492 = vrot.slane %v361, %v491
        %vm493 = vcmask 589312
        %v494 = vsel %vm493, %v492, %v487
        %v495 = vadd.s32 %v434, 4294967224
        %v496 = vlaneseq
        %v497 = vshrl.u32 %v496, 7
        %v498 = vsub.s32 %v495, %v497
        %v499 = vrot.slane %v362, %v498
        %vm500 = vcmask 654912
        %v501 = vsel %vm500, %v499, %v494
        %v502 = vadd.s32 %v434, 4294967216
        %v503 = vlaneseq
        %v504 = vshrl.u32 %v503, 7
        %v505 = vsub.s32 %v502, %v504
        %v506 = vrot.slane %v363, %v505
        %vm507 = vcmask 720512
        %v508 = vsel %vm507, %v506, %v501
        %v509 = vadd.s32 %v434, 4294967208
        %v510 = vlaneseq
        %v511 = vshrl.u32 %v510, 7
        %v512 = vsub.s32 %v509, %v511
        %v513 = vrot.slane %v364, %v512
        %vm514 = vcmask 786112
        %v515 = vsel %vm514, %v513, %v508
        %v516 = vadd.s32 %v434, 4294967200
        %v517 = vlaneseq
        %v518 = vshrl.u32 %v517, 7
        %v519 = vsub.s32 %v516, %v518
        %v520 = vrot.slane %v365, %v519
        %vm521 = vcmask 851712
        %v522 = vsel %vm521, %v520, %v515
        %v523 = vadd.s32 %v434, 4294967192
        %v524 = vlaneseq
        %v525 = vshrl.u32 %v524, 7
        %v526 = vsub.s32 %v523, %v525
        %v527 = vrot.slane %v366, %v526
        %vm528 = vcmask 917312
        %v529 = vsel %vm528, %v527, %v522
        %v530 = vadd.s32 %v434, 4294967184
        %v531 = vlaneseq
        %v532 = vshrl.u32 %v531, 7
        %v533 = vsub.s32 %v530, %v532
        %v534 = vrot.slane %v367, %v533
        %vm535 = vcmask 982912
        %v536 = vsel %vm535, %v534, %v529
        %v537 = vadd.s32 %v434, 4294967176
        %v538 = vlaneseq
        %v539 = vshrl.u32 %v538, 7
        %v540 = vsub.s32 %v537, %v539
        %v541 = vrot.slane %v368, %v540
        %vm542 = vcmask 1048512
        %v543 = vsel %vm542, %v541, %v536
        %v544 = vlaneseq
        %v545 = vshrl.u32 %v544, 7
        %v546 = vsub.s32 %v434, %v545
        %v547 = vrot.slane %v369, %v546
        %v548 = vlaneseq
        %v549 = vshrl.u32 %v548, 7
        %v550 = vsub.s32 %v439, %v549
        %v551 = vrot.slane %v370, %v550
        %v552 = vsel %vm444, %v551, %v547
        %v553 = vlaneseq
        %v554 = vshrl.u32 %v553, 7
        %v555 = vsub.s32 %v446, %v554
        %v556 = vrot.slane %v371, %v555
        %v557 = vsel %vm451, %v556, %v552
        %v558 = vlaneseq
        %v559 = vshrl.u32 %v558, 7
        %v560 = vsub.s32 %v453, %v559
        %v561 = vrot.slane %v372, %v560
        %v562 = vsel %vm458, %v561, %v557
        %v563 = vlaneseq
        %v564 = vshrl.u32 %v563, 7
        %v565 = vsub.s32 %v460, %v564
        %v566 = vrot.slane %v373, %v565
        %v567 = vsel %vm465, %v566, %v562
        %v568 = vlaneseq
        %v569 = vshrl.u32 %v568, 7
        %v570 = vsub.s32 %v467, %v569
        %v571 = vrot.slane %v374, %v570
        %v572 = vsel %vm472, %v571, %v567
        %v573 = vlaneseq
        %v574 = vshrl.u32 %v573, 7
        %v575 = vsub.s32 %v474, %v574
        %v576 = vrot.slane %v375, %v575
        %v577 = vsel %vm479, %v576, %v572
        %v578 = vlaneseq
        %v579 = vshrl.u32 %v578, 7
        %v580 = vsub.s32 %v481, %v579
        %v581 = vrot.slane %v376, %v580
        %v582 = vsel %vm486, %v581, %v577
        %v583 = vlaneseq
        %v584 = vshrl.u32 %v583, 7
        %v585 = vsub.s32 %v488, %v584
        %v586 = vrot.slane %v377, %v585
        %v587 = vsel %vm493, %v586, %v582
        %v588 = vlaneseq
        %v589 = vshrl.u32 %v588, 7
        %v590 = vsub.s32 %v495, %v589
        %v591 = vrot.slane %v378, %v590
        %v592 = vsel %vm500, %v591, %v587
        %v593 = vlaneseq
        %v594 = vshrl.u32 %v593, 7
        %v595 = vsub.s32 %v502, %v594
        %v596 = vrot.slane %v379, %v595
        %v597 = vsel %vm507, %v596, %v592
        %v598 = vlaneseq
        %v599 = vshrl.u32 %v598, 7
        %v600 = vsub.s32 %v509, %v599
        %v601 = vrot.slane %v380, %v600
        %v602 = vsel %vm514, %v601, %v597
        %v603 = vlaneseq
        %v604 = vshrl.u32 %v603, 7
        %v605 = vsub.s32 %v516, %v604
        %v606 = vrot.slane %v381, %v605
        %v607 = vsel %vm521, %v606, %v602
        %v608 = vlaneseq
        %v609 = vshrl.u32 %v608, 7
        %v610 = vsub.s32 %v523, %v609
        %v611 = vrot.slane %v382, %v610
        %v612 = vsel %vm528, %v611, %v607
        %v613 = vlaneseq
        %v614 = vshrl.u32 %v613, 7
        %v615 = vsub.s32 %v530, %v614
        %v616 = vrot.slane %v383, %v615
        %v617 = vsel %vm535, %v616, %v612
        %v618 = vlaneseq
        %v619 = vshrl.u32 %v618, 7
        %v620 = vsub.s32 %v537, %v619
        %v621 = vrot.slane %v384, %v620
        %v622 = vsel %vm542, %v621, %v617
        %vm623 = vcmask 1041409
        %v624 = vsel %vm623, %v622, %v543
        %626 = vmatprep.subr.mxu0 0.0
        %627 = vmatpush1.msra.mxu0 %v385
        %628 = vmatprep.subr.mxu0 0.0
        %629 = vmatpush1.msra.mxu0 %v386
        %630 = vmatprep.subr.mxu0 0.0
        %631 = vmatpush1.msra.mxu0 %v387
        %632 = vmatprep.subr.mxu0 0.0
        %633 = vmatpush1.msra.mxu0 %v388
        %634 = vmatprep.subr.mxu0 0.0
        %635 = vmatpush1.msra.mxu0 %v389
        %636 = vmatprep.subr.mxu0 0.0
        %637 = vmatpush1.msra.mxu0 %v390
        %638 = vmatprep.subr.mxu0 0.0
        %639 = vmatpush1.msra.mxu0 %v391
        %640 = vmatprep.subr.mxu0 0.0
        %641 = vmatpush1.msra.mxu0 %v392
        %642 = vmatprep.subr.mxu0 0.0
        %643 = vmatpush1.msra.mxu0 %v393
        %644 = vmatprep.subr.mxu0 0.0
        %645 = vmatpush1.msra.mxu0 %v394
        %646 = vmatprep.subr.mxu0 0.0
        %647 = vmatpush1.msra.mxu0 %v395
        %648 = vmatprep.subr.mxu0 0.0
        %649 = vmatpush1.msra.mxu0 %v396
        %650 = vmatprep.subr.mxu0 0.0
        %651 = vmatpush1.msra.mxu0 %v397
        %652 = vmatprep.subr.mxu0 0.0
        %653 = vmatpush1.msra.mxu0 %v398
        %654 = vmatprep.subr.mxu0 0.0
        %655 = vmatpush1.msra.mxu0 %v399
        %656 = vmatprep.subr.mxu0 0.0
        %657 = vmatpush1.msra.mxu0 %v400
        %658 = vmatprep.subr.mxu0 0.0
        %659 = vmatpush1.msra.mxu0 0.0
        %660 = vmatprep.subr.mxu0 0.0
        %661 = vmatpush1.msra.mxu0 0.0
        %662 = vmatprep.subr.mxu0 0.0
        %663 = vmatpush1.msra.mxu0 0.0
        %664 = vmatprep.subr.mxu0 0.0
        %665 = vmatpush1.msra.mxu0 0.0
        %666 = vmatprep.subr.mxu0 0.0
        %667 = vmatpush1.msra.mxu0 0.0
        %668 = vmatprep.subr.mxu0 0.0
        %669 = vmatpush1.msra.mxu0 0.0
        %670 = vmatprep.subr.mxu0 0.0
        %671 = vmatpush1.msra.mxu0 0.0
        %672 = vmatprep.subr.mxu0 0.0
        %673 = vmatpush1.msra.mxu0 0.0
        %674 = vmatprep.subr.mxu0 0.0
        %675 = vmatpush1.msra.mxu0 0.0
        %676 = vmatprep.subr.mxu0 0.0
        %677 = vmatpush1.msra.mxu0 0.0
        %678 = vmatprep.subr.mxu0 0.0
        %679 = vmatpush1.msra.mxu0 0.0
        %680 = vmatprep.subr.mxu0 0.0
        %681 = vmatpush1.msra.mxu0 0.0
        %682 = vmatprep.subr.mxu0 0.0
        %683 = vmatpush1.msra.mxu0 0.0
        %684 = vmatprep.subr.mxu0 0.0
        %685 = vmatpush1.msra.mxu0 0.0
        %686 = vmatprep.subr.mxu0 0.0
        %687 = vmatpush1.msra.mxu0 0.0
        %688 = vmatprep.subr.mxu0 0.0
        %689 = vmatpush1.msra.mxu0 0.0
        %690 = vmatprep.mubr.f32.mxu0 0.0
        %691 = vmatmul.mubr.f32.gmra.mrb[0].mxu0 %v624
        %v692 = vpop.f32.mrb[0].mxu0
        %v693 = vadd.f32 0.0, %v692
        %v694 = vpop.f32.mrb[0].mxu0
        %695 = vdwg.mxu0
        %v696 = vmax.f32 %v693, 0.0
        %v697 = vld [vmem:[%s2] sm:$0xff]
        %vm698 = vcmask 64512
        %v700 = vsel %vm698, %v696, 0
        %702 = vmatprep.subr.mxu0 0.0
        %703 = vmatpush1.msra.mxu0 %v697
        %704 = vmatprep.subr.mxu0 0.0
        %705 = vmatpush1.msra.mxu0 0.0
        %706 = vmatprep.subr.mxu0 0.0
        %707 = vmatpush1.msra.mxu0 0.0
        %708 = vmatprep.subr.mxu0 0.0
        %709 = vmatpush1.msra.mxu0 0.0
        %710 = vmatprep.subr.mxu0 0.0
        %711 = vmatpush1.msra.mxu0 0.0
        %712 = vmatprep.subr.mxu0 0.0
        %713 = vmatpush1.msra.mxu0 0.0
        %714 = vmatprep.subr.mxu0 0.0
        %715 = vmatpush1.msra.mxu0 0.0
        %716 = vmatprep.subr.mxu0 0.0
        %717 = vmatpush1.msra.mxu0 0.0
        %718 = vmatprep.subr.mxu0 0.0
        %719 = vmatpush1.msra.mxu0 0.0
        %720 = vmatprep.subr.mxu0 0.0
        %721 = vmatpush1.msra.mxu0 0.0
        %722 = vmatprep.subr.mxu0 0.0
        %723 = vmatpush1.msra.mxu0 0.0
        %724 = vmatprep.subr.mxu0 0.0
        %725 = vmatpush1.msra.mxu0 0.0
        %726 = vmatprep.subr.mxu0 0.0
        %727 = vmatpush1.msra.mxu0 0.0
        %728 = vmatprep.subr.mxu0 0.0
        %729 = vmatpush1.msra.mxu0 0.0
        %730 = vmatprep.subr.mxu0 0.0
        %731 = vmatpush1.msra.mxu0 0.0
        %732 = vmatprep.subr.mxu0 0.0
        %733 = vmatpush1.msra.mxu0 0.0
        %734 = vmatprep.subr.mxu0 0.0
        %735 = vmatpush1.msra.mxu0 0.0
        %736 = vmatprep.subr.mxu0 0.0
        %737 = vmatpush1.msra.mxu0 0.0
        %738 = vmatprep.subr.mxu0 0.0
        %739 = vmatpush1.msra.mxu0 0.0
        %740 = vmatprep.subr.mxu0 0.0
        %741 = vmatpush1.msra.mxu0 0.0
        %742 = vmatprep.subr.mxu0 0.0
        %743 = vmatpush1.msra.mxu0 0.0
        %744 = vmatprep.subr.mxu0 0.0
        %745 = vmatpush1.msra.mxu0 0.0
        %746 = vmatprep.subr.mxu0 0.0
        %747 = vmatpush1.msra.mxu0 0.0
        %748 = vmatprep.subr.mxu0 0.0
        %749 = vmatpush1.msra.mxu0 0.0
        %750 = vmatprep.subr.mxu0 0.0
        %751 = vmatpush1.msra.mxu0 0.0
        %752 = vmatprep.subr.mxu0 0.0
        %753 = vmatpush1.msra.mxu0 0.0
        %754 = vmatprep.subr.mxu0 0.0
        %755 = vmatpush1.msra.mxu0 0.0
        %756 = vmatprep.subr.mxu0 0.0
        %757 = vmatpush1.msra.mxu0 0.0
        %758 = vmatprep.subr.mxu0 0.0
        %759 = vmatpush1.msra.mxu0 0.0
        %760 = vmatprep.subr.mxu0 0.0
        %761 = vmatpush1.msra.mxu0 0.0
        %762 = vmatprep.subr.mxu0 0.0
        %763 = vmatpush1.msra.mxu0 0.0
        %764 = vmatprep.subr.mxu0 0.0
        %765 = vmatpush1.msra.mxu0 0.0
        %766 = vmatprep.mubr.f32.mxu0 0.0
        %767 = vmatmul.mubr.f32.gmra.mrb[0].mxu0 %v700
        %v768 = vpop.f32.mrb[0].mxu0
        %v769 = vadd.f32 0.0, %v768
        %v770 = vpop.f32.mrb[0].mxu0
        %771 = vdwg.mxu0
        %v772 = vxor.u32 %v769, 2147483648
        %v773 = vmul.f32 %v772, 1.442695
        %v774 = vpow.pop %v773
        %v775 = vadd.f32 %v774, 1.0
        %v776 = vrcp.pop %v775
        %v777 = vmul.f32 1.0, %v776
        %v778 = vlaneseq
        %v779 = vshrl.u32 %v778, 7
        %v780 = vsub.s32 0, %v779
        %v781 = vrot.slane %v777, %v780
        %783 = vbcast.lane.b32.xlu0 %v781, 256
        %v784 = vpop.permute.xlu0 %783
        %s786 = sor.u32 256, 8
        %787 = vbcast.lane.b32.xlu0 %v781, %s786
        %v788 = vpop.permute.xlu0 %787
        %s790 = sor.u32 256, 16
        %791 = vbcast.lane.b32.xlu0 %v781, %s790
        %v792 = vpop.permute.xlu0 %791
        %s794 = sor.u32 256, 24
        %795 = vbcast.lane.b32.xlu0 %v781, %s794
        %v796 = vpop.permute.xlu0 %795
        %s798 = sor.u32 256, 32
        %799 = vbcast.lane.b32.xlu0 %v781, %s798
        %v800 = vpop.permute.xlu0 %799
        %s802 = sor.u32 256, 40
        %803 = vbcast.lane.b32.xlu0 %v781, %s802
        %v804 = vpop.permute.xlu0 %803
        %s806 = sor.u32 256, 48
        %807 = vbcast.lane.b32.xlu0 %v781, %s806
        %v808 = vpop.permute.xlu0 %807
        %s810 = sor.u32 256, 56
        %811 = vbcast.lane.b32.xlu0 %v781, %s810
        %v812 = vpop.permute.xlu0 %811
        %s814 = sor.u32 256, 64
        %815 = vbcast.lane.b32.xlu0 %v781, %s814
        %v816 = vpop.permute.xlu0 %815
        %s818 = sor.u32 256, 72
        %819 = vbcast.lane.b32.xlu0 %v781, %s818
        %v820 = vpop.permute.xlu0 %819
        %s822 = sor.u32 256, 80
        %823 = vbcast.lane.b32.xlu0 %v781, %s822
        %v824 = vpop.permute.xlu0 %823
        %s826 = sor.u32 256, 88
        %827 = vbcast.lane.b32.xlu0 %v781, %s826
        %v828 = vpop.permute.xlu0 %827
        %s830 = sor.u32 256, 96
        %831 = vbcast.lane.b32.xlu0 %v781, %s830
        %v832 = vpop.permute.xlu0 %831
        %s834 = sor.u32 256, 104
        %835 = vbcast.lane.b32.xlu0 %v781, %s834
        %v836 = vpop.permute.xlu0 %835
        %s838 = sor.u32 256, 112
        %839 = vbcast.lane.b32.xlu0 %v781, %s838
        %v840 = vpop.permute.xlu0 %839
        %s842 = sor.u32 256, 120
        %843 = vbcast.lane.b32.xlu0 %v781, %s842
        %v844 = vpop.permute.xlu0 %843
        %v845 = vlaneseq
        %v846 = vshrl.u32 %v845, 7
        %v847 = vsub.s32 1, %v846
        %v848 = vrot.slane %v777, %v847
        %850 = vbcast.lane.b32.xlu0 %v848, 256
        %v851 = vpop.permute.xlu0 %850
        %s853 = sor.u32 256, 8
        %854 = vbcast.lane.b32.xlu0 %v848, %s853
        %v855 = vpop.permute.xlu0 %854
        %s857 = sor.u32 256, 16
        %858 = vbcast.lane.b32.xlu0 %v848, %s857
        %v859 = vpop.permute.xlu0 %858
        %s861 = sor.u32 256, 24
        %862 = vbcast.lane.b32.xlu0 %v848, %s861
        %v863 = vpop.permute.xlu0 %862
        %s865 = sor.u32 256, 32
        %866 = vbcast.lane.b32.xlu0 %v848, %s865
        %v867 = vpop.permute.xlu0 %866
        %s869 = sor.u32 256, 40
        %870 = vbcast.lane.b32.xlu0 %v848, %s869
        %v871 = vpop.permute.xlu0 %870
        %s873 = sor.u32 256, 48
        %874 = vbcast.lane.b32.xlu0 %v848, %s873
        %v875 = vpop.permute.xlu0 %874
        %s877 = sor.u32 256, 56
        %878 = vbcast.lane.b32.xlu0 %v848, %s877
        %v879 = vpop.permute.xlu0 %878
        %s881 = sor.u32 256, 64
        %882 = vbcast.lane.b32.xlu0 %v848, %s881
        %v883 = vpop.permute.xlu0 %882
        %s885 = sor.u32 256, 72
        %886 = vbcast.lane.b32.xlu0 %v848, %s885
        %v887 = vpop.permute.xlu0 %886
        %s889 = sor.u32 256, 80
        %890 = vbcast.lane.b32.xlu0 %v848, %s889
        %v891 = vpop.permute.xlu0 %890
        %s893 = sor.u32 256, 88
        %894 = vbcast.lane.b32.xlu0 %v848, %s893
        %v895 = vpop.permute.xlu0 %894
        %s897 = sor.u32 256, 96
        %898 = vbcast.lane.b32.xlu0 %v848, %s897
        %v899 = vpop.permute.xlu0 %898
        %s901 = sor.u32 256, 104
        %902 = vbcast.lane.b32.xlu0 %v848, %s901
        %v903 = vpop.permute.xlu0 %902
        %s905 = sor.u32 256, 112
        %906 = vbcast.lane.b32.xlu0 %v848, %s905
        %v907 = vpop.permute.xlu0 %906
        %s909 = sor.u32 256, 120
        %910 = vbcast.lane.b32.xlu0 %v848, %s909
        %v911 = vpop.permute.xlu0 %910
        %v912 = vmul.f32 %v192, %v784
        %v913 = vmul.f32 %v193, %v784
        %v914 = vmul.f32 %v194, %v788
        %v915 = vmul.f32 %v195, %v788
        %v916 = vmul.f32 %v196, %v792
        %v917 = vmul.f32 %v197, %v792
        %v918 = vmul.f32 %v198, %v796
        %v919 = vmul.f32 %v199, %v796
        %v920 = vmul.f32 %v200, %v800
        %v921 = vmul.f32 %v201, %v800
        %v922 = vmul.f32 %v202, %v804
        %v923 = vmul.f32 %v203, %v804
        %v924 = vmul.f32 %v204, %v808
        %v925 = vmul.f32 %v205, %v808
        %v926 = vmul.f32 %v206, %v812
        %v927 = vmul.f32 %v207, %v812
        %v928 = vmul.f32 %v208, %v816
        %v929 = vmul.f32 %v209, %v816
        %v930 = vmul.f32 %v210, %v820
        %v931 = vmul.f32 %v211, %v820
        %v932 = vmul.f32 %v212, %v824
        %v933 = vmul.f32 %v213, %v824
        %v934 = vmul.f32 %v214, %v828
        %v935 = vmul.f32 %v215, %v828
        %v936 = vmul.f32 %v216, %v832
        %v937 = vmul.f32 %v217, %v832
        %v938 = vmul.f32 %v218, %v836
        %v939 = vmul.f32 %v219, %v836
        %v940 = vmul.f32 %v220, %v840
        %v941 = vmul.f32 %v221, %v840
        %v942 = vmul.f32 %v222, %v844
        %v943 = vmul.f32 %v223, %v844
        %v944 = vmul.f32 %v224, %v851
        %v945 = vmul.f32 %v225, %v851
        %v946 = vmul.f32 %v226, %v855
        %v947 = vmul.f32 %v227, %v855
        %v948 = vmul.f32 %v228, %v859
        %v949 = vmul.f32 %v229, %v859
        %v950 = vmul.f32 %v230, %v863
        %v951 = vmul.f32 %v231, %v863
        %v952 = vmul.f32 %v232, %v867
        %v953 = vmul.f32 %v233, %v867
        %v954 = vmul.f32 %v234, %v871
        %v955 = vmul.f32 %v235, %v871
        %v956 = vmul.f32 %v236, %v875
        %v957 = vmul.f32 %v237, %v875
        %v958 = vmul.f32 %v238, %v879
        %v959 = vmul.f32 %v239, %v879
        %v960 = vmul.f32 %v240, %v883
        %v961 = vmul.f32 %v241, %v883
        %v962 = vmul.f32 %v242, %v887
        %v963 = vmul.f32 %v243, %v887
        %v964 = vmul.f32 %v244, %v891
        %v965 = vmul.f32 %v245, %v891
        %v966 = vmul.f32 %v246, %v895
        %v967 = vmul.f32 %v247, %v895
        %v968 = vmul.f32 %v248, %v899
        %v969 = vmul.f32 %v249, %v899
        %v970 = vmul.f32 %v250, %v903
        %v971 = vmul.f32 %v251, %v903
        %v972 = vmul.f32 %v252, %v907
        %v973 = vmul.f32 %v253, %v907
        %v974 = vmul.f32 %v254, %v911
        %v975 = vmul.f32 %v255, %v911
        %976 = vst [vmem:[%s189] sm:$0xff] %v912
        %977 = vst [vmem:[%s189 + $0x8] sm:$0xff] %v913
        %978 = vst [vmem:[%s189 + $0x10] sm:$0xff] %v914
        %979 = vst [vmem:[%s189 + $0x18] sm:$0xff] %v915
        %980 = vst [vmem:[%s189 + $0x20] sm:$0xff] %v916
        %981 = vst [vmem:[%s189 + $0x28] sm:$0xff] %v917
        %982 = vst [vmem:[%s189 + $0x30] sm:$0xff] %v918
        %983 = vst [vmem:[%s189 + $0x38] sm:$0xff] %v919
        %984 = vst [vmem:[%s189 + $0x40] sm:$0xff] %v920
        %985 = vst [vmem:[%s189 + $0x48] sm:$0xff] %v921
        %986 = vst [vmem:[%s189 + $0x50] sm:$0xff] %v922
        %987 = vst [vmem:[%s189 + $0x58] sm:$0xff] %v923
        %988 = vst [vmem:[%s189 + $0x60] sm:$0xff] %v924
        %989 = vst [vmem:[%s189 + $0x68] sm:$0xff] %v925
        %990 = vst [vmem:[%s189 + $0x70] sm:$0xff] %v926
        %991 = vst [vmem:[%s189 + $0x78] sm:$0xff] %v927
        %992 = vst [vmem:[%s189 + $0x80] sm:$0xff] %v928
        %993 = vst [vmem:[%s189 + $0x88] sm:$0xff] %v929
        %994 = vst [vmem:[%s189 + $0x90] sm:$0xff] %v930
        %995 = vst [vmem:[%s189 + $0x98] sm:$0xff] %v931
        %996 = vst [vmem:[%s189 + $0xa0] sm:$0xff] %v932
        %997 = vst [vmem:[%s189 + $0xa8] sm:$0xff] %v933
        %998 = vst [vmem:[%s189 + $0xb0] sm:$0xff] %v934
        %999 = vst [vmem:[%s189 + $0xb8] sm:$0xff] %v935
        %1000 = vst [vmem:[%s189 + $0xc0] sm:$0xff] %v936
        %1001 = vst [vmem:[%s189 + $0xc8] sm:$0xff] %v937
        %1002 = vst [vmem:[%s189 + $0xd0] sm:$0xff] %v938
        %1003 = vst [vmem:[%s189 + $0xd8] sm:$0xff] %v939
        %1004 = vst [vmem:[%s189 + $0xe0] sm:$0xff] %v940
        %1005 = vst [vmem:[%s189 + $0xe8] sm:$0xff] %v941
        %1006 = vst [vmem:[%s189 + $0xf0] sm:$0xff] %v942
        %1007 = vst [vmem:[%s189 + $0xf8] sm:$0xff] %v943
        %1008 = vst [vmem:[%s189 + $0x100] sm:$0xff] %v944
        %1009 = vst [vmem:[%s189 + $0x108] sm:$0xff] %v945
        %1010 = vst [vmem:[%s189 + $0x110] sm:$0xff] %v946
        %1011 = vst [vmem:[%s189 + $0x118] sm:$0xff] %v947
        %1012 = vst [vmem:[%s189 + $0x120] sm:$0xff] %v948
        %1013 = vst [vmem:[%s189 + $0x128] sm:$0xff] %v949
        %1014 = vst [vmem:[%s189 + $0x130] sm:$0xff] %v950
        %1015 = vst [vmem:[%s189 + $0x138] sm:$0xff] %v951
        %1016 = vst [vmem:[%s189 + $0x140] sm:$0xff] %v952
        %1017 = vst [vmem:[%s189 + $0x148] sm:$0xff] %v953
        %1018 = vst [vmem:[%s189 + $0x150] sm:$0xff] %v954
        %1019 = vst [vmem:[%s189 + $0x158] sm:$0xff] %v955
        %1020 = vst [vmem:[%s189 + $0x160] sm:$0xff] %v956
        %1021 = vst [vmem:[%s189 + $0x168] sm:$0xff] %v957
        %1022 = vst [vmem:[%s189 + $0x170] sm:$0xff] %v958
        %1023 = vst [vmem:[%s189 + $0x178] sm:$0xff] %v959
        %1024 = vst [vmem:[%s189 + $0x180] sm:$0xff] %v960
        %1025 = vst [vmem:[%s189 + $0x188] sm:$0xff] %v961
        %1026 = vst [vmem:[%s189 + $0x190] sm:$0xff] %v962
        %1027 = vst [vmem:[%s189 + $0x198] sm:$0xff] %v963
        %1028 = vst [vmem:[%s189 + $0x1a0] sm:$0xff] %v964
        %1029 = vst [vmem:[%s189 + $0x1a8] sm:$0xff] %v965
        %1030 = vst [vmem:[%s189 + $0x1b0] sm:$0xff] %v966
        %1031 = vst [vmem:[%s189 + $0x1b8] sm:$0xff] %v967
        %1032 = vst [vmem:[%s189 + $0x1c0] sm:$0xff] %v968
        %1033 = vst [vmem:[%s189 + $0x1c8] sm:$0xff] %v969
        %1034 = vst [vmem:[%s189 + $0x1d0] sm:$0xff] %v970
        %1035 = vst [vmem:[%s189 + $0x1d8] sm:$0xff] %v971
        %1036 = vst [vmem:[%s189 + $0x1e0] sm:$0xff] %v972
        %1037 = vst [vmem:[%s189 + $0x1e8] sm:$0xff] %v973
        %1038 = vst [vmem:[%s189 + $0x1f0] sm:$0xff] %v974
        %1039 = vst [vmem:[%s189 + $0x1f8] sm:$0xff] %v975
        %s1040 = sand.u32 %s96, 1
        %s1041 = scalar_lea.sflag [#allocation4], %s1040
        %s1042 = sand.u32 %s96, 1
        %s1043 = smul.addr %s1042, 512
        %s1044 = scalar_lea.vmem [#allocation5], %s1043
        // Predicated region
        $region37: #{tpu_custom_call.1} parent=31 // pred_check
          %p1045 = pneg %p106
        $region38: #{tpu_custom_call.1} parent=31 // pred_check_branch
          %1047 = sbr.rel (%p1045) target = $region40
        $region39: #{tpu_custom_call.1} parent=31 // pred_region
          %s1048 = smul.u32 2, %s20
          %s1050 = ssub.s32 8192, 8192
          %1051 = vsyncadd %s1041, %s1050
          %s1052 = smul.addr %s1048, 32
          %s1053 = smul.addr %s1052, 128
          %s1054 = scalar_lea.hbm %s3, %s1053
          %s1055 = sshll.u32 %s1044, 4
          %s1056 = int_to_ptr.vmem [resolvable:$true] %s1055
          %1061 = dma.vmem_to_hbm [thread:$0]  %s1056, 8192, %s1054, %s1041, 256, 256, 16
        $region40: #{tpu_custom_call.1} parent=31 // pred_fallthru
          _
      $region32: #{tpu_custom_call.1} parent=5 // pred_fallthru
        _
      %p1062 = scmp.le.s32.totalorder 2, %s15
      // Predicated region
      $region41: #{tpu_custom_call.1} parent=5 // pred_check
        %p1063 = pneg %p1062
      $region42: #{tpu_custom_call.1} parent=5 // pred_check_branch
        %1065 = sbr.rel (%p1063) target = $region44
      $region43: #{tpu_custom_call.1} parent=5 // pred_region
        %s1066 = ssub.s32 %s15, 2
        // Predicated region
        $region45: #{tpu_custom_call.1} parent=43 // pred_check
          %p1067 = pneg %p112
        $region46: #{tpu_custom_call.1} parent=43 // pred_check_branch
          %1069 = sbr.rel (%p1067) target = $region48
        $region47: #{tpu_custom_call.1} parent=43 // pred_region
          %s1070 = sand.u32 %s97, 1
          %s1071 = scalar_lea.sflag [#allocation4], %s1070
          %s1072 = sand.u32 %s97, 1
          %s1073 = smul.addr %s1072, 512
          %s1074 = scalar_lea.vmem [#allocation5], %s1073
          %1075 = dma.done %s1071, 8192
        $region48: #{tpu_custom_call.1} parent=43 // pred_fallthru
          _
      $region44: #{tpu_custom_call.1} parent=5 // pred_fallthru
        _
    $region6: #{tpu_custom_call.1} parent=1 // loop_footer
      %s19 = sadd.s32 1, %s15
    $region7: #{tpu_custom_call.1} parent=1 // loop_footer_branch
      %14 = sbr.rel target = $region3
    $region8: #{tpu_custom_call.1} parent=1 // loop_exit
      _
    %1076 = vsyncpa [#allocation3], 1
    %s1077 = scalar_lea.sflag [#allocation3], 1
    %1078 = vsyncpa %s1077, 1
    %1079 = vsyncpa [#allocation4], 1
    %s1080 = scalar_lea.sflag [#allocation4], 1
    %1081 = vsyncpa %s1080, 1

</llo_original>
